<compile_context>
chip_gen: v6e
topology: v6e:2x2x1
jax: 0.10.0
libtpu: 0.0.40
codegen_flags: <defaults>
</compile_context>

<pallas_src>
import functools
import math

import jax
import jax.numpy as jnp
from jax import lax
from jax.experimental import pallas as pl
from jax.experimental.pallas import tpu as pltpu


def _round_up(n, m):
    return -(-n // m) * m


def _max_tile_from_vmem(z_rows, c_pad, pool, z_bytes, budget_bytes=24 * 1024 * 1024):
    """Largest power-of-two lane tile (<= 8192) whose working set fits the VMEM budget."""
    per_lane = (2 * z_rows * z_bytes        # double-buffered Z block
                + 2 * c_pad * 4             # double-buffered pooled output block
                + 3 * pool * c_pad * 4)     # in-flight f32 activations / temporaries
    t = max(128, budget_bytes // max(per_lane, 1))
    tile = 128
    while tile * 2 <= min(t, 8192):
        tile *= 2
    return tile


def _choose_tile(n, max_tile):
    """Largest 128-multiple tile <= max_tile with acceptable padding waste on n."""
    n128 = _round_up(n, 128)
    for c in (8192, 4096, 2048, 1024, 512, 256, 128):
        if c > max_tile or c > n128:
            continue
        waste = _round_up(n, c) - n
        if waste <= max(c // 8, n128 - n):
            return c
    return 128


def _conv_elu_pool_stats_kernel(z_ref, wb_ref, bb_ref,
                                pooled_ref, s1_ref, s2_ref,
                                *, C_pad, pool, L_valid, needs_mask):
    """Conv (banded matmul) + bias + ELU + AvgPool presum + per-tile BN partial stats.

    z_ref:      (1, S*C_in, TJ)        phase-shifted input columns (see wrapper)
    wb_ref:     (pool*C_pad, S*C_in)   banded conv weight (phase p at col offset p*C_in)
    bb_ref:     (pool*C_pad, 1)        conv bias, tiled per phase
    pooled_ref: (1, C_pad, TJ)         AvgPool of ELU(conv) (pre-BN-affine)
    s1/s2_ref:  (1, C_pad, 1)          per-tile per-channel sum / sum-of-squares
    """
    z = z_ref[0]                                                        # (S*C_in, TJ)
    # One wide MXU matmul covers every pooling phase (rows ordered [p*C_pad + c]).
    y = jnp.dot(wb_ref[...], z, preferred_element_type=jnp.float32)    # (pool*C_pad, TJ) f32
    # Conv1d bias sits *before* the ELU nonlinearity -> cannot fold into the BN shift.
    y = y + bb_ref[...]
    # ELU(alpha=1); exp on the clamped-negative branch only (EUP slot, no overflow).
    y = jnp.where(y > 0, y, jnp.exp(jnp.minimum(y, 0.0)) - 1.0)

    if needs_mask:
        # Zero the padded lane columns so they do not contaminate the BN statistics
        # (their pooled outputs are cropped in the wrapper anyway).
        TJ = y.shape[-1]
        col = pl.program_id(1) * TJ + lax.broadcasted_iota(jnp.int32, (1, TJ), 1)
        y = y * (col < L_valid).astype(jnp.float32)

    # AvgPool presum + sum-of-squares over the pool phase row groups.
    # Slices start at multiples of C_pad (a multiple of 8) -> sublane-tile aligned.
    pool_acc = y[0:C_pad, :]
    sq_acc = pool_acc * pool_acc
    for p in range(1, pool):
        yp = y[p * C_pad:(p + 1) * C_pad, :]
        pool_acc = pool_acc + yp
        sq_acc = sq_acc + yp * yp

    pooled_ref[0] = pool_acc * (1.0 / pool)                             # lane-dense store
    # s1 comes for free from the pool accumulator (sum over phases already done).
    s1_ref[0] = jnp.sum(pool_acc, axis=-1, keepdims=True)
    s2_ref[0] = jnp.sum(sq_acc, axis=-1, keepdims=True)


def block_forward(x, w, b, gamma, beta, *,
                  conv_kernel_size=11, pool_kernel_size=4,
                  eps=1e-5, use_bf16_matmul=True,
                  vmem_budget_bytes=24 * 1024 * 1024):
    """Forward pass of `Block` (noise_shape=None). x: (B, C_in, L) -> (B, C_out, L//pool)."""
    B, C_in, L = x.shape
    C_out, C_in_w, K = w.shape
    pool = pool_kernel_size
    assert C_in_w == C_in
    assert K == conv_kernel_size
    assert K % 2 == 1, "padding=K//2 reproduces 'same' length only for odd K"
    assert L % pool == 0, "only L divisible by pool_kernel_size is supported"

    pad = K // 2
    L_out = L // pool
    S = K + pool - 1                     # number of phase shifts needed
    C_pad = _round_up(C_out, 8)          # f32 sublane-tile aligned phase blocks

    f32 = jnp.float32
    x = x.astype(f32)
    z_dtype = jnp.bfloat16 if use_bf16_matmul else f32
    z_bytes = 2 if use_bf16_matmul else 4

    # ---- tile / grid selection ------------------------------------------------
    max_tile = _max_tile_from_vmem(S * C_in, C_pad, pool, z_bytes, vmem_budget_bytes)
    TJ = _choose_tile(L_out, max_tile)
    L_pad = _round_up(L_out, TJ)
    nt_j = L_pad // TJ
    needs_mask = (L_pad != L_out)

    # ---- input prep: one fused XLA pass over the (small) input -----------------
    # 'same' padding, then Z[b, s*C_in + c, m] = x_pad[b, c, pool*m + s].  Phase p /
    # tap t of the conv reads Z row (p+t)*C_in + c, which the banded weight hits
    # directly -- no in-kernel slicing of Z.
    x_p = jnp.pad(x, ((0, 0), (0, 0), (pad, pad)))                      # (B, C_in, L+K-1)
    shifts = [x_p[:, :, s:s + pool * L_out:pool] for s in range(S)]     # (B, C_in, L_out) each
    Z = jnp.stack(shifts, axis=1).reshape(B, S * C_in, L_out)           # rows [s*C_in + c]
    if needs_mask:
        Z = jnp.pad(Z, ((0, 0), (0, 0), (0, L_pad - L_out)))
    Z = Z.astype(z_dtype)                                               # bf16 halves the big stream

    # Banded conv weight: W_band[p*C_pad + c, (p+t)*C_in + ci] = w[c, ci, t].
    W2 = w.astype(f32).transpose(0, 2, 1).reshape(C_out, K * C_in)      # cols [t*C_in + ci]
    W2 = jnp.pad(W2, ((0, C_pad - C_out), (0, 0)))                      # (C_pad, K*C_in)
    Wb = jnp.zeros((pool * C_pad, S * C_in), f32)
    for p in range(pool):
        Wb = Wb.at[p * C_pad:(p + 1) * C_pad, p * C_in:p * C_in + K * C_in].set(W2)
    Wb = Wb.astype(z_dtype)

    bias_band = jnp.tile(jnp.pad(b.astype(f32), (0, C_pad - C_out)).reshape(1, C_pad),
                         (pool, 1)).reshape(pool * C_pad, 1)

    cparams = pltpu.CompilerParams(
        dimension_semantics=("parallel", "parallel"),
        vmem_limit_bytes=40 * 1024 * 1024)          # v7x-safe (64 MiB/TC physical)

    kernel = functools.partial(_conv_elu_pool_stats_kernel,
                               C_pad=C_pad, pool=pool,
                               L_valid=L_out, needs_mask=needs_mask)

    # ---- single Pallas pass: conv + ELU + pool presum + BN partial stats -------
    pooled, s1p, s2p = pl.pallas_call(
        kernel,
        out_shape=(jax.ShapeDtypeStruct((B, C_pad, L_pad), f32),
                   jax.ShapeDtypeStruct((B * nt_j, C_pad, 1), f32),
                   jax.ShapeDtypeStruct((B * nt_j, C_pad, 1), f32)),
        grid=(B, nt_j),
        in_specs=[
            pl.BlockSpec((1, S * C_in, TJ), lambda bi, j: (bi, 0, j)),
            pl.BlockSpec((pool * C_pad, S * C_in), lambda bi, j: (0, 0)),
            pl.BlockSpec((pool * C_pad, 1), lambda bi, j: (0, 0)),
        ],
        out_specs=(
            pl.BlockSpec((1, C_pad, TJ), lambda bi, j: (bi, 0, j)),
            pl.BlockSpec((1, C_pad, 1), lambda bi, j: (bi * nt_j + j, 0, 0)),
            pl.BlockSpec((1, C_pad, 1), lambda bi, j: (bi * nt_j + j, 0, 0)),
        ),
        compiler_params=cparams,
    )(Z, Wb, bias_band)

    # ---- fold BN (training mode, biased var) + affine + crop: left to XLA ------
    # Pooling and the BN affine are both per-channel linear maps, so applying the
    # folded scale/shift to the 4x smaller pooled tensor is exact; it fuses with
    # the final crop, so no extra Pallas launch or transpose pass is needed.
    count = float(B * L)
    s1 = jnp.sum(s1p, axis=0)                         # (C_pad, 1)
    s2 = jnp.sum(s2p, axis=0)
    mean = s1 / count
    var = jnp.maximum(s2 / count - mean * mean, 0.0)  # clamp cancellation negatives
    gamma_p = jnp.pad(gamma.astype(f32), (0, C_pad - C_out)).reshape(C_pad, 1)
    beta_p = jnp.pad(beta.astype(f32), (0, C_pad - C_out)).reshape(C_pad, 1)
    scale = gamma_p * lax.rsqrt(var + eps)
    shift = beta_p - mean * scale
    out = pooled * scale[None] + shift[None]          # (B, C_pad, L_pad)
    return out[:, :C_out, :L_out]


def reference_block(x, w, b, gamma, beta, *, K, pool, eps=1e-5):
    """Pure-JAX reference of the PyTorch module (for the self-check)."""
    pad = K // 2
    y = lax.conv_general_dilated(
        x, w, window_strides=(1,), padding=[(pad, pad)],
        dimension_numbers=("NCH", "OIH", "NCH"),
        precision=lax.Precision.HIGHEST)
    y = y + b[None, :, None]
    y = jnp.where(y > 0, y, jnp.exp(y) - 1.0)                       # ELU(alpha=1)
    mean = jnp.mean(y, axis=(0, 2), keepdims=True)                  # training-mode BN
    var = jnp.mean((y - mean) ** 2, axis=(0, 2), keepdims=True)     # biased variance
    y = (y - mean) * lax.rsqrt(var + eps)
    y = y * gamma[None, :, None] + beta[None, :, None]
    Bb, C, Ll = y.shape
    Lo = Ll // pool
    return y[:, :, :Lo * pool].reshape(Bb, C, Lo, pool).mean(-1)    # AvgPool1d


if __name__ == "__main__":
    K, POOL = 11, 4

    def run_case(B, C_in, C_out, L, seed, use_bf16, tol):
        key = jax.random.PRNGKey(seed)
        kx, kw, kb, kg, kbe = jax.random.split(key, 5)
        x = jax.random.normal(kx, (B, C_in, L), dtype=jnp.float32)
        # Conv weight ~ kaiming_uniform_ as in Block.init_weights(); bias / BN affine
        # get small random values so the full affine path is exercised.
        fan_in = C_in * K
        bound = math.sqrt(2.0) * math.sqrt(3.0 / fan_in)
        w = jax.random.uniform(kw, (C_out, C_in, K), minval=-bound, maxval=bound,
                               dtype=jnp.float32)
        b = 0.1 * jax.random.normal(kb, (C_out,), dtype=jnp.float32)
        gamma = 1.0 + 0.1 * jax.random.normal(kg, (C_out,), dtype=jnp.float32)
        beta = 0.1 * jax.random.normal(kbe, (C_out,), dtype=jnp.float32)

        out = block_forward(x, w, b, gamma, beta, conv_kernel_size=K,
                            pool_kernel_size=POOL, use_bf16_matmul=use_bf16)
        out = jax.block_until_ready(out)
        assert out.shape == (B, C_out, L // POOL), out.shape

        ref = jax.block_until_ready(
            reference_block(x, w, b, gamma, beta, K=K, pool=POOL))
        max_err = float(jnp.max(jnp.abs(out - ref)))
        assert max_err < tol, (
            f"mismatch vs reference (bf16={use_bf16}, C_out={C_out}): max abs err {max_err}")

    # exact f32 MXU path (tight tolerance)
    run_case(B=2, C_in=4, C_out=8, L=16, seed=0, use_bf16=False, tol=5e-4)
    # default bf16 MXU path with f32 accumulation (looser tolerance)
    run_case(B=2, C_in=4, C_out=8, L=16, seed=0, use_bf16=True, tol=5e-2)
    # channel counts that are not multiples of 8 (exercises the C_pad padding path)
    run_case(B=2, C_in=3, C_out=6, L=32, seed=1, use_bf16=False, tol=5e-4)

    print("KERNEL_OK")
</pallas_src>

<mosaic_0001>
module attributes {stable_mosaic.version = 11 : i64} {
  func.func @_conv_elu_pool_stats_kernel(%arg0: i32, %arg1: i32, %arg2: memref<1x56x128xf32, #tpu.memory_space<vmem>>, %arg3: memref<32x56xf32, #tpu.memory_space<vmem>>, %arg4: memref<32x1xf32, #tpu.memory_space<vmem>>, %arg5: memref<1x8x128xf32, #tpu.memory_space<vmem>>, %arg6: memref<1x8x1xf32, #tpu.memory_space<vmem>>, %arg7: memref<1x8x1xf32, #tpu.memory_space<vmem>>) attributes {dimension_semantics = [#tpu.dimension_semantics<parallel>, #tpu.dimension_semantics<parallel>], iteration_bounds = array<i64: 2, 1>, scalar_prefetch = 0 : i64, scratch_operands = 0 : i64, tpu.core_type = #tpu.core_type<tc>, window_params = [{transform_indices = @transform_0, window_bounds = array<i64: 1, 56, 128>}, {pipeline_mode = #tpu.pipeline_mode<synchronous>, transform_indices = @transform_1, window_bounds = array<i64: 32, 56>}, {pipeline_mode = #tpu.pipeline_mode<synchronous>, transform_indices = @transform_2, window_bounds = array<i64: 32, 1>}, {transform_indices = @transform_3, window_bounds = array<i64: 1, 8, 128>}, {transform_indices = @transform_4, window_bounds = array<i64: 1, 8, 1>}, {transform_indices = @transform_5, window_bounds = array<i64: 1, 8, 1>}]} {
    %c0 = arith.constant 0 : index
    %c0_0 = arith.constant 0 : index
    %c0_1 = arith.constant 0 : index
    %0 = vector.load %arg2[%c0, %c0_0, %c0_1] : memref<1x56x128xf32, #tpu.memory_space<vmem>>, vector<1x56x128xf32>
    %1 = vector.shape_cast %0 : vector<1x56x128xf32> to vector<56x128xf32>
    %c0_2 = arith.constant 0 : index
    %c0_3 = arith.constant 0 : index
    %2 = vector.load %arg3[%c0_2, %c0_3] : memref<32x56xf32, #tpu.memory_space<vmem>>, vector<32x56xf32>
    %cst = arith.constant dense<0.000000e+00> : vector<32x128xf32>
    %3 = tpu.matmul %2, %1, %cst {dimension_numbers = #tpu.dot_dimension_numbers<[1], [0], [0], [1], [0, 0, 1, 1], [], []>} : vector<32x56xf32>, vector<56x128xf32>, vector<32x128xf32> -> vector<32x128xf32>
    %c0_4 = arith.constant 0 : index
    %c0_5 = arith.constant 0 : index
    %4 = vector.load %arg4[%c0_4, %c0_5] : memref<32x1xf32, #tpu.memory_space<vmem>>, vector<32x1xf32>
    %5 = vector.broadcast %4 : vector<32x1xf32> to vector<32x128xf32>
    %6 = arith.addf %3, %5 : vector<32x128xf32>
    %cst_6 = arith.constant 0.000000e+00 : f32
    %7 = vector.broadcast %cst_6 : f32 to vector<32x128xf32>
    %8 = arith.cmpf ogt, %6, %7 : vector<32x128xf32>
    %cst_7 = arith.constant 0.000000e+00 : f32
    %9 = vector.broadcast %cst_7 : f32 to vector<32x128xf32>
    %10 = arith.minimumf %6, %9 : vector<32x128xf32>
    %11 = math.exp %10 : vector<32x128xf32>
    %cst_8 = arith.constant 1.000000e+00 : f32
    %12 = vector.broadcast %cst_8 : f32 to vector<32x128xf32>
    %13 = arith.subf %11, %12 : vector<32x128xf32>
    %14 = arith.select %8, %6, %13 : vector<32x128xi1>, vector<32x128xf32>
    %c128_i32 = arith.constant 128 : i32
    %15 = arith.muli %arg1, %c128_i32 : i32
    %16 = tpu.iota {dimensions = array<i32: 1>} : vector<1x128xi32>
    %17 = vector.broadcast %15 : i32 to vector<1x128xi32>
    %18 = arith.addi %17, %16 : vector<1x128xi32>
    %c4_i32 = arith.constant 4 : i32
    %19 = vector.broadcast %c4_i32 : i32 to vector<1x128xi32>
    %20 = arith.cmpi slt, %18, %19 : vector<1x128xi32>
    %21 = arith.extui %20 : vector<1x128xi1> to vector<1x128xi32>
    %22 = arith.sitofp %21 : vector<1x128xi32> to vector<1x128xf32>
    %23 = vector.broadcast %22 : vector<1x128xf32> to vector<32x128xf32>
    %24 = arith.mulf %14, %23 : vector<32x128xf32>
    %25 = vector.extract_strided_slice %24 {offsets = [0, 0], sizes = [8, 128], strides = [1, 1]} : vector<32x128xf32> to vector<8x128xf32>
    %26 = arith.mulf %25, %25 : vector<8x128xf32>
    %27 = vector.extract_strided_slice %24 {offsets = [8, 0], sizes = [8, 128], strides = [1, 1]} : vector<32x128xf32> to vector<8x128xf32>
    %28 = arith.addf %25, %27 : vector<8x128xf32>
    %29 = arith.mulf %27, %27 : vector<8x128xf32>
    %30 = arith.addf %26, %29 : vector<8x128xf32>
    %31 = vector.extract_strided_slice %24 {offsets = [16, 0], sizes = [8, 128], strides = [1, 1]} : vector<32x128xf32> to vector<8x128xf32>
    %32 = arith.addf %28, %31 : vector<8x128xf32>
    %33 = arith.mulf %31, %31 : vector<8x128xf32>
    %34 = arith.addf %30, %33 : vector<8x128xf32>
    %35 = vector.extract_strided_slice %24 {offsets = [24, 0], sizes = [8, 128], strides = [1, 1]} : vector<32x128xf32> to vector<8x128xf32>
    %36 = arith.addf %32, %35 : vector<8x128xf32>
    %37 = arith.mulf %35, %35 : vector<8x128xf32>
    %38 = arith.addf %34, %37 : vector<8x128xf32>
    %cst_9 = arith.constant 2.500000e-01 : f32
    %39 = vector.broadcast %cst_9 : f32 to vector<8x128xf32>
    %40 = arith.mulf %36, %39 : vector<8x128xf32>
    %c0_10 = arith.constant 0 : index
    %c0_11 = arith.constant 0 : index
    %c0_12 = arith.constant 0 : index
    %41 = vector.load %arg5[%c0_10, %c0_11, %c0_12] : memref<1x8x128xf32, #tpu.memory_space<vmem>>, vector<1x8x128xf32>
    %42 = vector.shape_cast %41 : vector<1x8x128xf32> to vector<8x128xf32>
    %43 = vector.shape_cast %40 : vector<8x128xf32> to vector<1x8x128xf32>
    tpu.vector_store %arg5[%c0_10, %c0_11, %c0_12], %43 {strides = array<i32>} : memref<1x8x128xf32, #tpu.memory_space<vmem>>, vector<1x8x128xf32>,
    %cst_13 = arith.constant dense<0.000000e+00> : vector<8xf32>
    %44 = vector.multi_reduction <add>, %36, %cst_13 [1] : vector<8x128xf32> to vector<8xf32>
    %45 = vector.shape_cast %44 : vector<8xf32> to vector<8x1xf32>
    %c0_14 = arith.constant 0 : index
    %c0_15 = arith.constant 0 : index
    %c0_16 = arith.constant 0 : index
    %46 = vector.load %arg6[%c0_14, %c0_15, %c0_16] : memref<1x8x1xf32, #tpu.memory_space<vmem>>, vector<1x8x1xf32>
    %47 = vector.shape_cast %46 : vector<1x8x1xf32> to vector<8x1xf32>
    %48 = vector.shape_cast %45 : vector<8x1xf32> to vector<1x8x1xf32>
    tpu.vector_store %arg6[%c0_14, %c0_15, %c0_16], %48 {strides = array<i32>} : memref<1x8x1xf32, #tpu.memory_space<vmem>>, vector<1x8x1xf32>,
    %cst_17 = arith.constant dense<0.000000e+00> : vector<8xf32>
    %49 = vector.multi_reduction <add>, %38, %cst_17 [1] : vector<8x128xf32> to vector<8xf32>
    %50 = vector.shape_cast %49 : vector<8xf32> to vector<8x1xf32>
    %c0_18 = arith.constant 0 : index
    %c0_19 = arith.constant 0 : index
    %c0_20 = arith.constant 0 : index
    %51 = vector.load %arg7[%c0_18, %c0_19, %c0_20] : memref<1x8x1xf32, #tpu.memory_space<vmem>>, vector<1x8x1xf32>
    %52 = vector.shape_cast %51 : vector<1x8x1xf32> to vector<8x1xf32>
    %53 = vector.shape_cast %50 : vector<8x1xf32> to vector<1x8x1xf32>
    tpu.vector_store %arg7[%c0_18, %c0_19, %c0_20], %53 {strides = array<i32>} : memref<1x8x1xf32, #tpu.memory_space<vmem>>, vector<1x8x1xf32>,
    return
  }
  func.func @transform_0(%arg0: i32, %arg1: i32) -> (i32, i32, i32) {
    %c0_i32 = arith.constant 0 : i32
    %c0_i32_0 = arith.constant 0 : i32
    return %arg0, %c0_i32, %arg1 : i32, i32, i32
  }
  func.func @transform_1(%arg0: i32, %arg1: i32) -> (i32, i32) {
    %c0_i32 = arith.constant 0 : i32
    %c0_i32_0 = arith.constant 0 : i32
    %c0_i32_1 = arith.constant 0 : i32
    return %c0_i32, %c0_i32_0 : i32, i32
  }
  func.func @transform_2(%arg0: i32, %arg1: i32) -> (i32, i32) {
    %c0_i32 = arith.constant 0 : i32
    %c0_i32_0 = arith.constant 0 : i32
    %c0_i32_1 = arith.constant 0 : i32
    return %c0_i32, %c0_i32_0 : i32, i32
  }
  func.func @transform_3(%arg0: i32, %arg1: i32) -> (i32, i32, i32) {
    %c0_i32 = arith.constant 0 : i32
    %c0_i32_0 = arith.constant 0 : i32
    return %arg0, %c0_i32, %arg1 : i32, i32, i32
  }
  func.func @transform_4(%arg0: i32, %arg1: i32) -> (i32, i32, i32) {
    %c1_i32 = arith.constant 1 : i32
    %0 = arith.muli %arg0, %c1_i32 : i32
    %1 = arith.addi %0, %arg1 : i32
    %c0_i32 = arith.constant 0 : i32
    %c0_i32_0 = arith.constant 0 : i32
    %c0_i32_1 = arith.constant 0 : i32
    return %1, %c0_i32, %c0_i32_0 : i32, i32, i32
  }
  func.func @transform_5(%arg0: i32, %arg1: i32) -> (i32, i32, i32) {
    %c1_i32 = arith.constant 1 : i32
    %0 = arith.muli %arg0, %c1_i32 : i32
    %1 = arith.addi %0, %arg1 : i32
    %c0_i32 = arith.constant 0 : i32
    %c0_i32_0 = arith.constant 0 : i32
    %c0_i32_1 = arith.constant 0 : i32
    return %1, %c0_i32, %c0_i32_0 : i32, i32, i32
  }
}

</mosaic_0001>

<llo_original>
// kernel: tpu_custom_call.1
$region0: #{tpu_custom_call.1}
  #allocation0 [shape = 'u32[]', space=smem, size = 0x4, offset = 0x4, fixed_abs, tag = 'smem constant byte address 0x4 - core index']
  #allocation1 [shape = 'u32[144,128]{1,0:T(1,128)}', space=vmem, size = 0x12000, scoped, tag = 'internal scratch']
  %s0 = inlined_call_operand.hbm [shape: f32[2,56,128], index: 0, kind: input, shape index: {}]
  %s1 = inlined_call_operand.vmem [shape: f32[32,56], index: 1, kind: input, shape index: {}]
  %s2 = inlined_call_operand.vmem [shape: f32[32,1], index: 2, kind: input, shape index: {}]
  %s3 = inlined_call_operand.hbm [shape: f32[2,8,128], index: 3, kind: output, shape index: {0}]
  %s4 = inlined_call_operand.vmem [shape: f32[2,8,1], index: 4, kind: output, shape index: {1}]
  %s5 = inlined_call_operand.vmem [shape: f32[2,8,1], index: 5, kind: output, shape index: {2}]
  %6 = xla_tuple %s3, %s4, %s5
  %s7 = sld [smem:[#allocation0]]
  $region65: #{tpu_custom_call.1} parent=0
    _
  %s9 = ssub.s32 1, %s7
  %s10 = scalar_select 0, %s9, %s7
  $region1: #{tpu_custom_call.1} parent=0
    #allocation2 [shape = 'u8[57344]{0}', space=vmem, size = 0xe000, scoped, tag = 'input window, operand 0']
    #allocation3 [shape = 's32[2]{0}', space=sflag, size = 0x8, scoped, tag = 'scoped memory for tpu_custom_call.1']
    #allocation4 [shape = 's32[2]{0}', space=sflag, size = 0x8, scoped, tag = 'scoped memory for tpu_custom_call.1']
    #allocation5 [shape = 'u8[8192]{0}', space=vmem, size = 0x2000, scoped, tag = 'output window, operand 0']
    %11 = vsyncpa [#allocation3], 0
    %s12 = scalar_lea.sflag [#allocation3], 1
    %13 = vsyncpa %s12, 0
    %14 = vsyncpa [#allocation4], 0
    %s15 = scalar_lea.sflag [#allocation4], 1
    %16 = vsyncpa %s15, 0
    loop: start=0, step=1, limit=4
    $region2: #{tpu_custom_call.1} parent=1 // loop_pre_header
      _
    $region3: #{tpu_custom_call.1} parent=1 // loop_header
      %s18 = sphi 0, %s22
      %p19 = scmp.ge.s32.totalorder %s18, 4
      %s25 = sphi 0, %s37
      %s26 = sphi 0, %s33
      %s27 = sphi 0, %s25
      %s28 = sphi 0, %s26
      %s29 = sphi 0, %s27
      %s30 = sphi 0, %s28
      %s42 = sphi 0, %s44
      %s45 = sphi 0, %s42
      %s46 = sphi 0, %s45
      %s62 = sphi 0, %s46
      %s66 = sphi 0, %s66
      %s68 = sphi 0, %s66
      %s69 = sphi 0, %s68
      %s83 = sphi 0, %s69
      %s87 = sphi 0, %s87
      %s89 = sphi 0, %s87
      %s90 = sphi 0, %s89
      %s104 = sphi 0, %s90
      %s112 = sphi 0, %s114
      %s115 = sphi 0, %s112
      %s116 = sphi 0, %s115
      %s132 = sphi 0, %s116
      %s140 = sphi 0, %s142
      %s143 = sphi 0, %s140
      %s144 = sphi 0, %s143
      %s160 = sphi 0, %s144
      %s168 = sphi 0, %s170
      %s171 = sphi 0, %s168
      %s172 = sphi 0, %s171
      %s188 = sphi 0, %s172
    $region4: #{tpu_custom_call.1} parent=1 // loop_header_branch
      %21 = sbr.rel (%p19) target = $region8
    $region5: #{tpu_custom_call.1} parent=1 // loop_body
      %s23 = ssub.s32 %s18, 1
      %s24 = ssub.s32 %s18, 2
      %s31 = sadd.s32 1, %s26
      %p32 = scmp.ge.s32.totalorder %s31, 1
      %s33 = scalar_select %p32, 0, %s31
      %s34 = sadd.s32 1, %s25
      %s35 = scalar_select %p32, %s34, %s25
      %p36 = scmp.ge.s32.totalorder %s35, 2
      %s37 = scalar_select %p36, 0, %s35
      %s38 = ssub.s32 %s25, %s37
      %s39 = ssub.s32 %s26, %s33
      %s40 = sor.u32 %s38, %s39
      %p41 = scmp.eq.s32.totalorder %s40, 0
      %s43 = sadd.s32 %s42, 1
      %s44 = scalar_select %p41, %s42, %s43
      %p47 = pneg %p41
      %p48 = scmp.eq.s32.totalorder %s18, 1
      %p49 = por %p47, %p48
      %p50 = scmp.ne.s32.totalorder %s42, %s45
      %p51 = scmp.eq.s32.totalorder %s18, 0
      %p52 = por %p50, %p51
      %p53 = scmp.ne.s32.totalorder %s42, %s45
      %p54 = scmp.eq.s32.totalorder %s23, 1
      %p55 = por %p53, %p54
      %p56 = scmp.ne.s32.totalorder %s45, %s46
      %p57 = scmp.eq.s32.totalorder %s23, 0
      %p58 = por %p56, %p57
      %p59 = scmp.ne.s32.totalorder %s45, %s46
      %p60 = scmp.eq.s32.totalorder %s24, 1
      %p61 = por %p59, %p60
      %p63 = scmp.ne.s32.totalorder %s46, %s62
      %p64 = scmp.eq.s32.totalorder %s24, 0
      %p65 = por %p63, %p64
      %s67 = sadd.s32 %s66, 1
      %p70 = scmp.eq.s32.totalorder %s18, 1
      %p71 = scmp.ne.s32.totalorder %s66, %s68
      %p72 = scmp.eq.s32.totalorder %s18, 0
      %p73 = por %p71, %p72
      %p74 = scmp.ne.s32.totalorder %s66, %s68
      %p75 = scmp.eq.s32.totalorder %s23, 1
      %p76 = por %p74, %p75
      %p77 = scmp.ne.s32.totalorder %s68, %s69
      %p78 = scmp.eq.s32.totalorder %s23, 0
      %p79 = por %p77, %p78
      %p80 = scmp.ne.s32.totalorder %s68, %s69
      %p81 = scmp.eq.s32.totalorder %s24, 1
      %p82 = por %p80, %p81
      %p84 = scmp.ne.s32.totalorder %s69, %s83
      %p85 = scmp.eq.s32.totalorder %s24, 0
      %p86 = por %p84, %p85
      %s88 = sadd.s32 %s87, 1
      %p91 = scmp.eq.s32.totalorder %s18, 1
      %p92 = scmp.ne.s32.totalorder %s87, %s89
      %p93 = scmp.eq.s32.totalorder %s18, 0
      %p94 = por %p92, %p93
      %p95 = scmp.ne.s32.totalorder %s87, %s89
      %p96 = scmp.eq.s32.totalorder %s23, 1
      %p97 = por %p95, %p96
      %p98 = scmp.ne.s32.totalorder %s89, %s90
      %p99 = scmp.eq.s32.totalorder %s23, 0
      %p100 = por %p98, %p99
      %p101 = scmp.ne.s32.totalorder %s89, %s90
      %p102 = scmp.eq.s32.totalorder %s24, 1
      %p103 = por %p101, %p102
      %p105 = scmp.ne.s32.totalorder %s90, %s104
      %p106 = scmp.eq.s32.totalorder %s24, 0
      %p107 = por %p105, %p106
      %s108 = ssub.s32 %s25, %s37
      %s109 = ssub.s32 %s26, %s33
      %s110 = sor.u32 %s108, %s109
      %p111 = scmp.eq.s32.totalorder %s110, 0
      %s113 = sadd.s32 %s112, 1
      %s114 = scalar_select %p111, %s112, %s113
      %p117 = pneg %p111
      %p118 = scmp.eq.s32.totalorder %s18, 1
      %p119 = por %p117, %p118
      %p120 = scmp.ne.s32.totalorder %s112, %s115
      %p121 = scmp.eq.s32.totalorder %s18, 0
      %p122 = por %p120, %p121
      %p123 = scmp.ne.s32.totalorder %s112, %s115
      %p124 = scmp.eq.s32.totalorder %s23, 1
      %p125 = por %p123, %p124
      %p126 = scmp.ne.s32.totalorder %s115, %s116
      %p127 = scmp.eq.s32.totalorder %s23, 0
      %p128 = por %p126, %p127
      %p129 = scmp.ne.s32.totalorder %s115, %s116
      %p130 = scmp.eq.s32.totalorder %s24, 1
      %p131 = por %p129, %p130
      %p133 = scmp.ne.s32.totalorder %s116, %s132
      %p134 = scmp.eq.s32.totalorder %s24, 0
      %p135 = por %p133, %p134
      %s136 = sadd.s32 %s25, %s26
      %s137 = sadd.s32 %s37, %s33
      %s138 = ssub.s32 %s136, %s137
      %p139 = scmp.eq.s32.totalorder %s138, 0
      %s141 = sadd.s32 %s140, 1
      %s142 = scalar_select %p139, %s140, %s141
      %p145 = pneg %p139
      %p146 = scmp.eq.s32.totalorder %s18, 1
      %p147 = por %p145, %p146
      %p148 = scmp.ne.s32.totalorder %s140, %s143
      %p149 = scmp.eq.s32.totalorder %s18, 0
      %p150 = por %p148, %p149
      %p151 = scmp.ne.s32.totalorder %s140, %s143
      %p152 = scmp.eq.s32.totalorder %s23, 1
      %p153 = por %p151, %p152
      %p154 = scmp.ne.s32.totalorder %s143, %s144
      %p155 = scmp.eq.s32.totalorder %s23, 0
      %p156 = por %p154, %p155
      %p157 = scmp.ne.s32.totalorder %s143, %s144
      %p158 = scmp.eq.s32.totalorder %s24, 1
      %p159 = por %p157, %p158
      %p161 = scmp.ne.s32.totalorder %s144, %s160
      %p162 = scmp.eq.s32.totalorder %s24, 0
      %p163 = por %p161, %p162
      %s164 = sadd.s32 %s25, %s26
      %s165 = sadd.s32 %s37, %s33
      %s166 = ssub.s32 %s164, %s165
      %p167 = scmp.eq.s32.totalorder %s166, 0
      %s169 = sadd.s32 %s168, 1
      %s170 = scalar_select %p167, %s168, %s169
      %p173 = pneg %p167
      %p174 = scmp.eq.s32.totalorder %s18, 1
      %p175 = por %p173, %p174
      %p176 = scmp.ne.s32.totalorder %s168, %s171
      %p177 = scmp.eq.s32.totalorder %s18, 0
      %p178 = por %p176, %p177
      %p179 = scmp.ne.s32.totalorder %s168, %s171
      %p180 = scmp.eq.s32.totalorder %s23, 1
      %p181 = por %p179, %p180
      %p182 = scmp.ne.s32.totalorder %s171, %s172
      %p183 = scmp.eq.s32.totalorder %s23, 0
      %p184 = por %p182, %p183
      %p185 = scmp.ne.s32.totalorder %s171, %s172
      %p186 = scmp.eq.s32.totalorder %s24, 1
      %p187 = por %p185, %p186
      %p189 = scmp.ne.s32.totalorder %s172, %s188
      %p190 = scmp.eq.s32.totalorder %s24, 0
      %p191 = por %p189, %p190
      %p192 = scmp.le.s32.totalorder 1, %s18
      %p193 = scmp.lt.s32.totalorder %s18, 3
      %p194 = pnand %p192, %p193
      %p195 = pneg %p194
      // Predicated region
      $region9: #{tpu_custom_call.1} parent=5 // pred_check
        _
      $region10: #{tpu_custom_call.1} parent=5 // pred_check_branch
        %197 = sbr.rel (%p194) target = $region12
      $region11: #{tpu_custom_call.1} parent=5 // pred_region
        %s198 = ssub.s32 %s18, 1
        // Predicated region
        $region13: #{tpu_custom_call.1} parent=11 // pred_check
          %p199 = pneg %p79
        $region14: #{tpu_custom_call.1} parent=11 // pred_check_branch
          %201 = sbr.rel (%p199) target = $region16
        $region15: #{tpu_custom_call.1} parent=11 // pred_region
          _
        $region16: #{tpu_custom_call.1} parent=11 // pred_fallthru
          _
        // Predicated region
        $region17: #{tpu_custom_call.1} parent=11 // pred_check
          %p202 = pneg %p100
        $region18: #{tpu_custom_call.1} parent=11 // pred_check_branch
          %204 = sbr.rel (%p202) target = $region20
        $region19: #{tpu_custom_call.1} parent=11 // pred_region
          _
        $region20: #{tpu_custom_call.1} parent=11 // pred_fallthru
          _
      $region12: #{tpu_custom_call.1} parent=5 // pred_fallthru
        _
      %p205 = scmp.lt.s32.totalorder %s18, 2
      // Predicated region
      $region21: #{tpu_custom_call.1} parent=5 // pred_check
        %p206 = pneg %p205
      $region22: #{tpu_custom_call.1} parent=5 // pred_check_branch
        %208 = sbr.rel (%p206) target = $region24
      $region23: #{tpu_custom_call.1} parent=5 // pred_region
        // Predicated region
        $region25: #{tpu_custom_call.1} parent=23 // pred_check
          %p209 = pneg %p52
        $region26: #{tpu_custom_call.1} parent=23 // pred_check_branch
          %211 = sbr.rel (%p209) target = $region28
        $region27: #{tpu_custom_call.1} parent=23 // pred_region
          %s212 = sand.u32 %s42, 1
          %s213 = scalar_lea.sflag [#allocation3], %s212
          %s214 = sand.u32 %s42, 1
          %s215 = smul.addr %s214, 56
          %s216 = scalar_lea.vmem [#allocation2], %s215
          %s218 = ssub.s32 896, 896
          %219 = vsyncadd %s213, %s218
          %s220 = smul.addr %s25, 7
          %s221 = sadd.s32 %s26, %s220
          %s222 = smul.addr %s221, 128
          %s223 = scalar_lea.hbm %s0, %s222
          %s224 = sshll.u32 %s216, 4
          %s225 = int_to_ptr.vmem [resolvable:$true] %s224
          %230 = dma.hbm_to_vmem [thread:$0]  %s223, 896, %s225, %s213, 128, 128, 8
        $region28: #{tpu_custom_call.1} parent=23 // pred_fallthru
          _
      $region24: #{tpu_custom_call.1} parent=5 // pred_fallthru
        _
      %p231 = scmp.le.s32.totalorder 1, %s18
      %p232 = scmp.lt.s32.totalorder %s18, 3
      %p233 = pnand %p231, %p232
      %p234 = pneg %p233
      // Predicated region
      $region29: #{tpu_custom_call.1} parent=5 // pred_check
        _
      $region30: #{tpu_custom_call.1} parent=5 // pred_check_branch
        %236 = sbr.rel (%p233) target = $region32
      $region31: #{tpu_custom_call.1} parent=5 // pred_region
        %s237 = ssub.s32 %s18, 1
        %s238 = sand.u32 %s45, 1
        %s239 = scalar_lea.sflag [#allocation3], %s238
        %s240 = sand.u32 %s45, 1
        %s241 = smul.addr %s240, 56
        %s242 = scalar_lea.vmem [#allocation2], %s241
        // Predicated region
        $region33: #{tpu_custom_call.1} parent=31 // pred_check
          %p243 = pneg %p58
        $region34: #{tpu_custom_call.1} parent=31 // pred_check_branch
          %245 = sbr.rel (%p243) target = $region36
        $region35: #{tpu_custom_call.1} parent=31 // pred_region
          %246 = dma.done %s239, 896
        $region36: #{tpu_custom_call.1} parent=31 // pred_fallthru
          _
        %s247 = sand.u32 %s45, 1
        %s248 = scalar_lea.sflag [#allocation3], %s247
        %s249 = sand.u32 %s45, 1
        %s250 = smul.addr %s249, 56
        %s251 = scalar_lea.vmem [#allocation2], %s250
        %p252 = pneg %p58
        %p253 = pneg %p55
        %p254 = pneg %p79
        %p255 = pneg %p76
        %p256 = pneg %p100
        %p257 = pneg %p97
        %p258 = pneg %p128
        %p259 = pneg %p125
        %s260 = sand.u32 %s115, 1
        %s261 = scalar_lea.sflag [#allocation4], %s260
        %s262 = sand.u32 %s115, 1
        %s263 = smul.addr %s262, 8
        %s264 = scalar_lea.vmem [#allocation5], %s263
        %p265 = pneg %p156
        %p266 = pneg %p153
        %s267 = sadd.s32 %s27, %s28
        %p268 = scmp.lt.s32.totalorder %s267, 1
        %s269 = scalar_select %p268, %s267, 1
        %s270 = smul.addr %s269, 8
        %s271 = scalar_lea.vmem %s4, %s270
        %p272 = pneg %p184
        %p273 = pneg %p181
        %s274 = sadd.s32 %s27, %s28
        %p275 = scmp.lt.s32.totalorder %s274, 1
        %s276 = scalar_select %p275, %s274, 1
        %s277 = smul.addr %s276, 8
        %s278 = scalar_lea.vmem %s5, %s277
        %s279 = sadd.s32 %s27, %s28
        %p280 = scmp.lt.s32.totalorder %s279, 1
        %s281 = scalar_select %p280, %s279, 1
        %s282 = smul.addr %s281, 8
        %s283 = scalar_lea.vmem %s4, %s282
        %s284 = sadd.s32 %s27, %s28
        %s285 = sadd.s32 %s27, %s28
        %p286 = scmp.lt.s32.totalorder %s285, 1
        %s287 = scalar_select %p286, %s285, 1
        %s288 = smul.addr %s287, 8
        %s289 = scalar_lea.vmem %s5, %s288
        %s290 = sadd.s32 %s27, %s28
        %v291 = vld [vmem:[%s242] sm:$0xff]
        %v292 = vld [vmem:[%s242 + $0x8] sm:$0xff]
        %v293 = vld [vmem:[%s242 + $0x10] sm:$0xff]
        %v294 = vld [vmem:[%s242 + $0x18] sm:$0xff]
        %v295 = vld [vmem:[%s242 + $0x20] sm:$0xff]
        %v296 = vld [vmem:[%s242 + $0x28] sm:$0xff]
        %v297 = vld [vmem:[%s242 + $0x30] sm:$0xff]
        %v298 = vld [vmem:[%s1] sm:$0xff]
        %v299 = vld [vmem:[%s1 + $0x8] sm:$0xff]
        %v300 = vld [vmem:[%s1 + $0x10] sm:$0xff]
        %v301 = vld [vmem:[%s1 + $0x18] sm:$0xff]
        %v302 = vld [vmem:[%s2] sm:$0xff]
        %v303 = vld [vmem:[%s2 + $0x8] sm:$0xff]
        %v304 = vld [vmem:[%s2 + $0x10] sm:$0xff]
        %v305 = vld [vmem:[%s2 + $0x18] sm:$0xff]
        %307 = vset.pattern.permute.xlu0 0
        %308 = vperm.xlu0 %307, %v302
        %v309 = vpop.permute.xlu0 %308
        %312 = vset.pattern.permute.xlu0 0
        %313 = vperm.xlu0 %312, %v303
        %v314 = vpop.permute.xlu0 %313
        %317 = vset.pattern.permute.xlu0 0
        %318 = vperm.xlu0 %317, %v304
        %v319 = vpop.permute.xlu0 %318
        %322 = vset.pattern.permute.xlu0 0
        %323 = vperm.xlu0 %322, %v305
        %v324 = vpop.permute.xlu0 %323
        %vm326 = vcmask 457728
        %v328 = vsel %vm326, %v298, 0
        %v331 = vsel %vm326, %v299, 0
        %v334 = vsel %vm326, %v300, 0
        %v337 = vsel %vm326, %v301, 0
        %339 = vmatprep.subr.mxu0 0.0
        %340 = vmatpush1.msra.mxu0 0.0
        %341 = vmatprep.subr.mxu0 0.0
        %342 = vmatpush1.msra.mxu0 0.0
        %343 = vmatprep.subr.mxu0 0.0
        %344 = vmatpush1.msra.mxu0 0.0
        %345 = vmatprep.subr.mxu0 0.0
        %346 = vmatpush1.msra.mxu0 0.0
        %347 = vmatprep.subr.mxu0 0.0
        %348 = vmatpush1.msra.mxu0 0.0
        %349 = vmatprep.subr.mxu0 0.0
        %350 = vmatpush1.msra.mxu0 0.0
        %351 = vmatprep.subr.mxu0 0.0
        %352 = vmatpush1.msra.mxu0 0.0
        %353 = vmatprep.subr.mxu0 0.0
        %354 = vmatpush1.msra.mxu0 0.0
        %355 = vmatprep.subr.mxu0 0.0
        %356 = vmatpush1.msra.mxu0 0.0
        %357 = vmatprep.subr.mxu0 0.0
        %358 = vmatpush1.msra.mxu0 %v297
        %359 = vmatprep.subr.mxu0 0.0
        %360 = vmatpush1.msra.mxu0 %v296
        %361 = vmatprep.subr.mxu0 0.0
        %362 = vmatpush1.msra.mxu0 %v295
        %363 = vmatprep.subr.mxu0 0.0
        %364 = vmatpush1.msra.mxu0 %v294
        %365 = vmatprep.subr.mxu0 0.0
        %366 = vmatpush1.msra.mxu0 %v293
        %367 = vmatprep.subr.mxu0 0.0
        %368 = vmatpush1.msra.mxu0 %v292
        %369 = vmatprep.subr.mxu0 0.0
        %370 = vmatpush1.msra.mxu0 %v291
        %371 = vmatprep.subr.mxu0 0.0
        %372 = vmatpush2.msra.mxu0 0.0
        %373 = vmatprep.subr.mxu0 0.0
        %374 = vmatpush2.msra.mxu0 0.0
        %375 = vmatprep.subr.mxu0 0.0
        %376 = vmatpush2.msra.mxu0 0.0
        %377 = vmatprep.subr.mxu0 0.0
        %378 = vmatpush2.msra.mxu0 0.0
        %379 = vmatprep.subr.mxu0 0.0
        %380 = vmatpush2.msra.mxu0 0.0
        %381 = vmatprep.subr.mxu0 0.0
        %382 = vmatpush2.msra.mxu0 0.0
        %383 = vmatprep.subr.mxu0 0.0
        %384 = vmatpush2.msra.mxu0 0.0
        %385 = vmatprep.subr.mxu0 0.0
        %386 = vmatpush2.msra.mxu0 0.0
        %387 = vmatprep.subr.mxu0 0.0
        %388 = vmatpush2.msra.mxu0 0.0
        %389 = vmatprep.subr.mxu0 0.0
        %390 = vmatpush2.msra.mxu0 0.0
        %391 = vmatprep.subr.mxu0 0.0
        %392 = vmatpush2.msra.mxu0 0.0
        %393 = vmatprep.subr.mxu0 0.0
        %394 = vmatpush2.msra.mxu0 0.0
        %395 = vmatprep.subr.mxu0 0.0
        %396 = vmatpush2.msra.mxu0 0.0
        %397 = vmatprep.subr.mxu0 0.0
        %398 = vmatpush2.msra.mxu0 0.0
        %399 = vmatprep.subr.mxu0 0.0
        %400 = vmatpush2.msra.mxu0 0.0
        %401 = vmatprep.subr.mxu0 0.0
        %402 = vmatpush2.msra.mxu0 0.0
        %403 = vmatprep.mubr.f32.mxu0 0.0
        %404 = vmatmul.mubr.f32.gmra.mxu0 %v328
        %v405 = vpop.f32.mrf.mxu0
        %v406 = vadd.f32 %v309, %v405
        %v407 = vpop.f32.mrf.mxu0
        %408 = vmatprep.mubr.f32.mxu0 0.0
        %409 = vmatmul.mubr.f32.gmra.mxu0 %v331
        %v410 = vpop.f32.mrf.mxu0
        %v411 = vadd.f32 %v314, %v410
        %v412 = vpop.f32.mrf.mxu0
        %413 = vmatprep.mubr.f32.mxu0 0.0
        %414 = vmatmul.mubr.f32.gmra.mxu0 %v334
        %v415 = vpop.f32.mrf.mxu0
        %v416 = vadd.f32 %v319, %v415
        %v417 = vpop.f32.mrf.mxu0
        %418 = vmatprep.mubr.f32.mxu0 0.0
        %419 = vmatmul.mubr.f32.gmra.mxu0 %v337
        %v420 = vpop.f32.mrf.mxu0
        %v421 = vadd.f32 %v324, %v420
        %v422 = vpop.f32.mrf.mxu0
        %423 = vdwg.mxu0
        %vm424 = vcmp.gt.f32.partialorder %v406, 0.0
        %vm425 = vcmp.gt.f32.partialorder %v411, 0.0
        %vm426 = vcmp.gt.f32.partialorder %v416, 0.0
        %vm427 = vcmp.gt.f32.partialorder %v421, 0.0
        %v428 = vmin.f32 %v406, 0.0
        %v429 = vmin.f32 %v411, 0.0
        %v430 = vmin.f32 %v416, 0.0
        %v431 = vmin.f32 %v421, 0.0
        %v432 = vmul.f32 %v428, 1.442695
        %v433 = vpow.pop %v432
        %v434 = vmul.f32 %v429, 1.442695
        %v435 = vpow.pop %v434
        %v436 = vmul.f32 %v430, 1.442695
        %v437 = vpow.pop %v436
        %v438 = vmul.f32 %v431, 1.442695
        %v439 = vpow.pop %v438
        %v440 = vsub.f32 %v433, 1.0
        %v441 = vsub.f32 %v435, 1.0
        %v442 = vsub.f32 %v437, 1.0
        %v443 = vsub.f32 %v439, 1.0
        %v444 = vsel %vm424, %v406, %v440
        %v445 = vsel %vm425, %v411, %v441
        %v446 = vsel %vm426, %v416, %v442
        %v447 = vsel %vm427, %v421, %v443
        %s448 = smul.u32 %s28, 128
        %v449 = vlaneseq
        %v450 = vand.u32 %v449, 127
        %v451 = vstv %s448
        %v452 = vadd.s32 %v451, %v450
        %vm453 = vcmp.lt.s32.totalorder %v452, 4
        %v454 = vsel %vm453, 1, 0
        %v455 = vcvt.s32.f32 %v454
        %v456 = vmul.f32 %v444, %v455
        %v457 = vmul.f32 %v445, %v455
        %v458 = vmul.f32 %v446, %v455
        %v459 = vmul.f32 %v447, %v455
        %v460 = vmul.f32 %v456, %v456
        %v461 = vadd.f32 %v456, %v457
        %v462 = vmul.f32 %v457, %v457
        %v463 = vadd.f32 %v460, %v462
        %v464 = vadd.f32 %v461, %v458
        %v465 = vmul.f32 %v458, %v458
        %v466 = vadd.f32 %v463, %v465
        %v467 = vadd.f32 %v464, %v459
        %v468 = vmul.f32 %v459, %v459
        %v469 = vadd.f32 %v466, %v468
        %v470 = vmul.f32 %v467, 0.25
        %471 = vst [vmem:[%s264] sm:$0xff] %v470
        %472 = vadd.xlane.f32.xlu0 %v467
        %v473 = vpop.xlane.xlu0 %472
        %vm474 = vcmask 7168
        %475 = vst.msk [vmem:[%s283] sm:$0xff] %vm474, %v473
        %476 = vadd.xlane.f32.xlu0 %v469
        %v477 = vpop.xlane.xlu0 %476
        %478 = vst.msk [vmem:[%s289] sm:$0xff] %vm474, %v477
        %s479 = sand.u32 %s115, 1
        %s480 = scalar_lea.sflag [#allocation4], %s479
        %s481 = sand.u32 %s115, 1
        %s482 = smul.addr %s481, 8
        %s483 = scalar_lea.vmem [#allocation5], %s482
        %s484 = sadd.s32 %s27, %s28
        %p485 = scmp.lt.s32.totalorder %s484, 1
        %s486 = scalar_select %p485, %s484, 1
        %s487 = smul.addr %s486, 8
        %s488 = scalar_lea.vmem %s4, %s487
        %s489 = sadd.s32 %s27, %s28
        %p490 = scmp.lt.s32.totalorder %s489, 1
        %s491 = scalar_select %p490, %s489, 1
        %s492 = smul.addr %s491, 8
        %s493 = scalar_lea.vmem %s5, %s492
        // Predicated region
        $region37: #{tpu_custom_call.1} parent=31 // pred_check
          %p494 = pneg %p125
        $region38: #{tpu_custom_call.1} parent=31 // pred_check_branch
          %496 = sbr.rel (%p494) target = $region40
        $region39: #{tpu_custom_call.1} parent=31 // pred_region
          %s498 = ssub.s32 128, 128
          %499 = vsyncadd %s480, %s498
          %s500 = sadd.s32 %s28, %s27
          %s501 = smul.addr %s500, 128
          %s502 = scalar_lea.hbm %s3, %s501
          %s504 = sshll.u32 %s483, 4
          %s505 = int_to_ptr.vmem [resolvable:$true] %s504
          %507 = dma.vmem_to_hbm [thread:$0]  %s505, 128, %s502, %s480
        $region40: #{tpu_custom_call.1} parent=31 // pred_fallthru
          _
        // Predicated region
        $region41: #{tpu_custom_call.1} parent=31 // pred_check
          %p508 = pneg %p153
        $region42: #{tpu_custom_call.1} parent=31 // pred_check_branch
          %510 = sbr.rel (%p508) target = $region44
        $region43: #{tpu_custom_call.1} parent=31 // pred_region
          %s511 = sadd.s32 %s27, %s28
        $region44: #{tpu_custom_call.1} parent=31 // pred_fallthru
          _
        // Predicated region
        $region45: #{tpu_custom_call.1} parent=31 // pred_check
          %p512 = pneg %p181
        $region46: #{tpu_custom_call.1} parent=31 // pred_check_branch
          %514 = sbr.rel (%p512) target = $region48
        $region47: #{tpu_custom_call.1} parent=31 // pred_region
          %s515 = sadd.s32 %s27, %s28
        $region48: #{tpu_custom_call.1} parent=31 // pred_fallthru
          _
      $region32: #{tpu_custom_call.1} parent=5 // pred_fallthru
        _
      %p516 = scmp.le.s32.totalorder 2, %s18
      // Predicated region
      $region49: #{tpu_custom_call.1} parent=5 // pred_check
        %p517 = pneg %p516
      $region50: #{tpu_custom_call.1} parent=5 // pred_check_branch
        %519 = sbr.rel (%p517) target = $region52
      $region51: #{tpu_custom_call.1} parent=5 // pred_region
        %s520 = ssub.s32 %s18, 2
        // Predicated region
        $region53: #{tpu_custom_call.1} parent=51 // pred_check
          %p521 = pneg %p131
        $region54: #{tpu_custom_call.1} parent=51 // pred_check_branch
          %523 = sbr.rel (%p521) target = $region56
        $region55: #{tpu_custom_call.1} parent=51 // pred_region
          %s524 = sand.u32 %s116, 1
          %s525 = scalar_lea.sflag [#allocation4], %s524
          %s526 = sand.u32 %s116, 1
          %s527 = smul.addr %s526, 8
          %s528 = scalar_lea.vmem [#allocation5], %s527
          %529 = dma.done %s525, 128
        $region56: #{tpu_custom_call.1} parent=51 // pred_fallthru
          _
        // Predicated region
        $region57: #{tpu_custom_call.1} parent=51 // pred_check
          %p530 = pneg %p159
        $region58: #{tpu_custom_call.1} parent=51 // pred_check_branch
          %532 = sbr.rel (%p530) target = $region60
        $region59: #{tpu_custom_call.1} parent=51 // pred_region
          %s533 = sadd.s32 %s29, %s30
          %p534 = scmp.lt.s32.totalorder %s533, 1
          %s535 = scalar_select %p534, %s533, 1
          %s536 = smul.addr %s535, 8
          %s537 = scalar_lea.vmem %s4, %s536
        $region60: #{tpu_custom_call.1} parent=51 // pred_fallthru
          _
        // Predicated region
        $region61: #{tpu_custom_call.1} parent=51 // pred_check
          %p538 = pneg %p187
        $region62: #{tpu_custom_call.1} parent=51 // pred_check_branch
          %540 = sbr.rel (%p538) target = $region64
        $region63: #{tpu_custom_call.1} parent=51 // pred_region
          %s541 = sadd.s32 %s29, %s30
          %p542 = scmp.lt.s32.totalorder %s541, 1
          %s543 = scalar_select %p542, %s541, 1
          %s544 = smul.addr %s543, 8
          %s545 = scalar_lea.vmem %s5, %s544
        $region64: #{tpu_custom_call.1} parent=51 // pred_fallthru
          _
      $region52: #{tpu_custom_call.1} parent=5 // pred_fallthru
        _
    $region6: #{tpu_custom_call.1} parent=1 // loop_footer
      %s22 = sadd.s32 1, %s18
    $region7: #{tpu_custom_call.1} parent=1 // loop_footer_branch
      %17 = sbr.rel target = $region3
    $region8: #{tpu_custom_call.1} parent=1 // loop_exit
      _
    %546 = vsyncpa [#allocation3], 1
    %s547 = scalar_lea.sflag [#allocation3], 1
    %548 = vsyncpa %s547, 1
    %549 = vsyncpa [#allocation4], 1
    %s550 = scalar_lea.sflag [#allocation4], 1
    %551 = vsyncpa %s550, 1

</llo_original>
